<compile_context>
chip_gen: v6e
topology: v6e:2x2x1
jax: 0.10.0
libtpu: 0.0.40
codegen_flags: <defaults>
</compile_context>

<pallas_src>
import functools

import jax
import jax.numpy as jnp
from jax.experimental import pallas as pl
from jax.experimental.pallas import tpu as pltpu


_LANE = 128
_MAX_POOL_CHUNKS = 32          # bounds the unrolled per-step accumulate loop


def _round_down(x, m):
    return (x // m) * m


def _vmem_limits():
    """Per-generation scoped-VMEM limit and block budget (bytes)."""
    try:
        phys = pltpu.get_tpu_info().vmem_capacity_bytes
    except Exception:
        phys = 64 * 1024 * 1024                      # conservative (v7x per-TC)
    # v5e/v6e (128 MiB physical) -> 96 MiB limit; v7x (64 MiB) -> 48 MiB.
    limit = max(32 * 1024 * 1024, min(96 * 1024 * 1024, (phys * 3) // 4))
    budget = limit - 8 * 1024 * 1024                 # headroom for compiler scratch
    return limit, budget


def _choose_batch_tile(B, C, itemsize, budget):
    b_tile = B
    if B >= 2:
        b_tile = max(1, B // 2)        # >= 2 parallel batch blocks (v7x: 2 TCs)
    if b_tile >= 8:
        b_tile = _round_down(b_tile, 8)   # sublane-aligned accumulator rows
    while B % b_tile != 0:
        b_tile -= 1
    # Safety: a single 128-lane slab (double-buffered in + out) must fit.
    while b_tile > 1 and 4 * b_tile * C * _LANE * itemsize > budget:
        b_tile = max(1, b_tile // 2)
        while B % b_tile != 0:
            b_tile -= 1
    return b_tile


def _choose_time_tile(T, bytes_per_t, budget, max_tile=None):
    """Largest lane-dense (128-multiple) time tile fitting the budget.

    Accepts one masked partial tile instead of shrinking to an exact divisor
    of T (which degraded to 128-wide tiles / short DMA rows for awkward T).
    """
    if T <= _LANE:
        # TODO(synk): for realistic T < 128 shapes, restructure pass 2 so the
        # lane dim stays >= 128 (sub-128 lanes force masked vst.msk stores).
        return T
    fit = _round_down(max(budget, 0) // max(bytes_per_t, 1), _LANE)
    t_tile = max(_LANE, min(fit, _round_down(T, _LANE)))
    if max_tile is not None:
        t_tile = max(_LANE, min(t_tile, max_tile))
    return t_tile


# ---------------------------------------------------------------------------
# Pass 1: lane-wise f32 time-sum -> (B, C, 1) pooled sums.
# ---------------------------------------------------------------------------
def _pool_kernel(x_ref, sums_ref, acc_ref, *, t_tile, lane, last_valid,
                 mask_last):
    # x_ref    : (Bb, C, Tt)    native dtype
    # sums_ref : (Bb, C, 1)     f32, written once at the last time step
    # acc_ref  : (Bb, C, lane)  f32 lane-wise running sums (scratch)
    t = pl.program_id(1)
    nt = pl.num_programs(1)
    n_chunks = t_tile // lane

    @pl.when(t == 0)
    def _init():
        acc_ref[...] = jnp.zeros_like(acc_ref)

    def _accumulate(valid):
        # `valid` is a static python int: number of valid time steps in tile.
        partial = acc_ref[...]
        for k in range(n_chunks):
            lo = k * lane
            if lo >= valid:            # statically skip fully-padded chunks
                break
            xk = x_ref[:, :, lo:lo + lane].astype(jnp.float32)
            if lo + lane > valid:      # only the straddling chunk is masked
                col = jax.lax.broadcasted_iota(jnp.int32, (1, 1, lane), 2)
                xk = jnp.where(col < (valid - lo), xk, 0.0)
            partial = partial + xk     # plain VPU adds, no per-step XLU reduce
        acc_ref[...] = partial

    if mask_last:
        @pl.when(t < nt - 1)
        def _full_tiles():
            _accumulate(t_tile)

        @pl.when(t == nt - 1)
        def _partial_tile():
            _accumulate(last_valid)
    else:
        _accumulate(t_tile)

    @pl.when(t == nt - 1)
    def _finalize():
        # Single cross-lane reduce per batch tile.
        sums_ref[...] = jnp.sum(acc_ref[...], axis=-1, keepdims=True)


# ---------------------------------------------------------------------------
# Pass 2: y = scale * x, streamed over lane-dense time tiles in native dtype.
# ---------------------------------------------------------------------------
def _scale_kernel(x_ref, scale_ref, o_ref):
    o_ref[...] = scale_ref[...].astype(o_ref.dtype) * x_ref[...]


# ---------------------------------------------------------------------------
# Wrapper.
# ---------------------------------------------------------------------------
def se_block_1d(x, w1, w2):
    """x: (B, C, T); w1: (H, C) conv1 weight; w2: (C, H) conv2 weight."""
    B, C, T = x.shape
    H = w1.shape[0]
    assert w1.shape == (H, C) and w2.shape == (C, H)

    itemsize = x.dtype.itemsize
    vmem_limit, budget = _vmem_limits()

    b_tile = _choose_batch_tile(B, C, itemsize, budget)
    nb = B // b_tile

    # --- Pass 1: pooled time-sums ------------------------------------------
    # Only x is double-buffered; output / accumulator are small, so pass 1 can
    # afford its own larger time tile (capped to bound the unrolled chunk loop).
    acc_bytes = b_tile * C * _LANE * 4
    t1 = _choose_time_tile(T, 2 * b_tile * C * itemsize, budget - acc_bytes,
                           max_tile=_MAX_POOL_CHUNKS * _LANE)
    lane1 = min(_LANE, t1)
    nt1 = pl.cdiv(T, t1)
    last_valid1 = T - (nt1 - 1) * t1
    mask_last1 = last_valid1 != t1

    sums = pl.pallas_call(
        functools.partial(_pool_kernel, t_tile=t1, lane=lane1,
                          last_valid=last_valid1, mask_last=mask_last1),
        out_shape=jax.ShapeDtypeStruct((B, C, 1), jnp.float32),
        grid_spec=pltpu.PrefetchScalarGridSpec(
            num_scalar_prefetch=0,
            grid=(nb, nt1),
            in_specs=[pl.BlockSpec((b_tile, C, t1), lambda b, t: (b, 0, t))],
            out_specs=pl.BlockSpec((b_tile, C, 1), lambda b, t: (b, 0, 0)),
            scratch_shapes=[pltpu.VMEM((b_tile, C, lane1), jnp.float32)],
        ),
        compiler_params=pltpu.CompilerParams(
            dimension_semantics=("parallel", "arbitrary"),
            vmem_limit_bytes=vmem_limit,
        ),
    )(x)

    # --- Excitation (tiny: H = C/r) in plain JAX between the two passes -----
    z = sums[:, :, 0] * jnp.float32(1.0 / T)                       # (B, C)
    h = jnp.maximum(z @ w1.T.astype(jnp.float32), 0.0)             # (B, H)
    s = jax.nn.sigmoid(h @ w2.T.astype(jnp.float32))               # (B, C)
    scale = s[:, :, None]                                          # (B, C, 1)

    # --- Pass 2: y = scale * x ----------------------------------------------
    t2 = _choose_time_tile(T, 4 * b_tile * C * itemsize, budget)
    nt2 = pl.cdiv(T, t2)

    out = pl.pallas_call(
        _scale_kernel,
        out_shape=jax.ShapeDtypeStruct((B, C, T), x.dtype),
        grid_spec=pltpu.PrefetchScalarGridSpec(
            num_scalar_prefetch=0,
            grid=(nb, nt2),
            in_specs=[
                pl.BlockSpec((b_tile, C, t2), lambda b, t: (b, 0, t)),
                pl.BlockSpec((b_tile, C, 1), lambda b, t: (b, 0, 0)),
            ],
            out_specs=pl.BlockSpec((b_tile, C, t2), lambda b, t: (b, 0, t)),
        ),
        compiler_params=pltpu.CompilerParams(
            dimension_semantics=("parallel", "parallel"),
            vmem_limit_bytes=vmem_limit,
        ),
    )(x, scale)

    return out


def reference(x, w1, w2):
    """Pure-JAX reference mirroring the PyTorch forward."""
    z = jnp.mean(x, axis=2)                       # (B, C)
    h = jnp.maximum(z @ w1.T, 0.0)                # (B, H)
    s = jax.nn.sigmoid(h @ w2.T)                  # (B, C)
    return s[:, :, None] * x


if __name__ == "__main__":
    key = jax.random.PRNGKey(0)
    kx, k1, k2, kx2 = jax.random.split(key, 4)

    # SEBlock1d hyperparameters: num_channels=64, r=16 -> bottleneck H=4.
    B, C, T = 2, 64, 128
    r = 16
    H = C // r

    x = jax.random.normal(kx, (B, C, T), dtype=jnp.float32)
    # Conv1d(kernel_size=1, bias=False) weights (out, in, 1) -> (out, in).
    w1 = jax.random.normal(k1, (H, C), dtype=jnp.float32) * (1.0 / jnp.sqrt(C))
    w2 = jax.random.normal(k2, (C, H), dtype=jnp.float32) * (1.0 / jnp.sqrt(H))

    y = jax.block_until_ready(se_block_1d(x, w1, w2))
    y_ref = reference(x, w1, w2)
    assert y.shape == (B, C, T)
    assert jnp.allclose(y, y_ref, atol=1e-5, rtol=1e-5)

    # Second case: T not a multiple of 128 -> exercises the masked partial
    # time tile in pass 1 and partial output blocks in pass 2.
    T2 = 160
    x2 = jax.random.normal(kx2, (B, C, T2), dtype=jnp.float32)
    y2 = jax.block_until_ready(se_block_1d(x2, w1, w2))
    y2_ref = reference(x2, w1, w2)
    assert y2.shape == (B, C, T2)
    assert jnp.allclose(y2, y2_ref, atol=1e-5, rtol=1e-5)

    print("KERNEL_OK")
</pallas_src>

<mosaic_0001>
module attributes {stable_mosaic.version = 11 : i64} {
  func.func @_pool_kernel(%arg0: i32, %arg1: i32, %arg2: memref<1x64x128xf32, #tpu.memory_space<vmem>>, %arg3: memref<1x64x1xf32, #tpu.memory_space<vmem>>, %arg4: memref<1x64x128xf32, #tpu.memory_space<vmem>>) attributes {dimension_semantics = [#tpu.dimension_semantics<parallel>, #tpu.dimension_semantics<arbitrary>], iteration_bounds = array<i64: 2, 1>, scalar_prefetch = 0 : i64, scratch_operands = 1 : i64, tpu.core_type = #tpu.core_type<tc>, window_params = [{transform_indices = @transform_0, window_bounds = array<i64: 1, 64, 128>}, {transform_indices = @transform_1, window_bounds = array<i64: 1, 64, 1>}]} {
    %c0_i32 = arith.constant 0 : i32
    %0 = arith.cmpi eq, %arg1, %c0_i32 : i32
    %1 = arith.extui %0 : i1 to i32
    %c0_i32_0 = arith.constant 0 : i32
    %2 = arith.cmpi ne, %1, %c0_i32_0 : i32
    scf.if %2 {
      %cst = arith.constant 0.000000e+00 : f32
      %10 = vector.broadcast %cst : f32 to vector<1x64x128xf32>
      %c0_11 = arith.constant 0 : index
      %c0_12 = arith.constant 0 : index
      %c0_13 = arith.constant 0 : index
      %11 = vector.load %arg4[%c0_11, %c0_12, %c0_13] : memref<1x64x128xf32, #tpu.memory_space<vmem>>, vector<1x64x128xf32>
      tpu.vector_store %arg4[%c0_11, %c0_12, %c0_13], %10 {strides = array<i32>} : memref<1x64x128xf32, #tpu.memory_space<vmem>>, vector<1x64x128xf32>,
    } else {
    }
    %c0 = arith.constant 0 : index
    %c0_1 = arith.constant 0 : index
    %c0_2 = arith.constant 0 : index
    %3 = vector.load %arg4[%c0, %c0_1, %c0_2] : memref<1x64x128xf32, #tpu.memory_space<vmem>>, vector<1x64x128xf32>
    %c0_3 = arith.constant 0 : index
    %c0_4 = arith.constant 0 : index
    %c0_5 = arith.constant 0 : index
    %4 = vector.load %arg2[%c0_3, %c0_4, %c0_5] : memref<1x64x128xf32, #tpu.memory_space<vmem>>, vector<1x64x128xf32>
    %5 = arith.addf %3, %4 : vector<1x64x128xf32>
    %c0_6 = arith.constant 0 : index
    %c0_7 = arith.constant 0 : index
    %c0_8 = arith.constant 0 : index
    %6 = vector.load %arg4[%c0_6, %c0_7, %c0_8] : memref<1x64x128xf32, #tpu.memory_space<vmem>>, vector<1x64x128xf32>
    tpu.vector_store %arg4[%c0_6, %c0_7, %c0_8], %5 {strides = array<i32>} : memref<1x64x128xf32, #tpu.memory_space<vmem>>, vector<1x64x128xf32>,
    %c0_i32_9 = arith.constant 0 : i32
    %7 = arith.cmpi eq, %arg1, %c0_i32_9 : i32
    %8 = arith.extui %7 : i1 to i32
    %c0_i32_10 = arith.constant 0 : i32
    %9 = arith.cmpi ne, %8, %c0_i32_10 : i32
    scf.if %9 {
      %c0_11 = arith.constant 0 : index
      %c0_12 = arith.constant 0 : index
      %c0_13 = arith.constant 0 : index
      %10 = vector.load %arg4[%c0_11, %c0_12, %c0_13] : memref<1x64x128xf32, #tpu.memory_space<vmem>>, vector<1x64x128xf32>
      %cst = arith.constant dense<0.000000e+00> : vector<1x64xf32>
      %11 = vector.multi_reduction <add>, %10, %cst [2] : vector<1x64x128xf32> to vector<1x64xf32>
      %12 = vector.shape_cast %11 : vector<1x64xf32> to vector<1x64x1xf32>
      %c0_14 = arith.constant 0 : index
      %c0_15 = arith.constant 0 : index
      %c0_16 = arith.constant 0 : index
      %13 = vector.load %arg3[%c0_14, %c0_15, %c0_16] : memref<1x64x1xf32, #tpu.memory_space<vmem>>, vector<1x64x1xf32>
      tpu.vector_store %arg3[%c0_14, %c0_15, %c0_16], %12 {strides = array<i32>} : memref<1x64x1xf32, #tpu.memory_space<vmem>>, vector<1x64x1xf32>,
    } else {
    }
    return
  }
  func.func @transform_0(%arg0: i32, %arg1: i32) -> (i32, i32, i32) {
    %c0_i32 = arith.constant 0 : i32
    %c0_i32_0 = arith.constant 0 : i32
    return %arg0, %c0_i32, %arg1 : i32, i32, i32
  }
  func.func @transform_1(%arg0: i32, %arg1: i32) -> (i32, i32, i32) {
    %c0_i32 = arith.constant 0 : i32
    %c0_i32_0 = arith.constant 0 : i32
    %c0_i32_1 = arith.constant 0 : i32
    return %arg0, %c0_i32, %c0_i32_0 : i32, i32, i32
  }
}

</mosaic_0001>

<llo_original>
// kernel: tpu_custom_call.1
$region0: #{tpu_custom_call.1}
  #allocation0 [shape = 'u32[]', space=smem, size = 0x4, offset = 0x4, fixed_abs, tag = 'smem constant byte address 0x4 - core index']
  #allocation1 [shape = 'u32[144,128]{1,0:T(1,128)}', space=vmem, size = 0x12000, scoped, tag = 'internal scratch']
  #allocation2 [shape = 'f32[1,64,128]{2,1,0:T(8,128)}', space=vmem, size = 0x8000, scoped, tag = 'scratch operand']
  %s0 = inlined_call_operand.hbm [shape: f32[2,64,128], index: 0, kind: input, shape index: {}]
  %s1 = inlined_call_operand.vmem [shape: f32[2,64,1], index: 1, kind: output, shape index: {}]
  %s2 = sld [smem:[#allocation0]]
  $region49: #{tpu_custom_call.1} parent=0
    _
  %s4 = ssub.s32 1, %s2
  %s5 = scalar_select 0, %s4, %s2
  $region1: #{tpu_custom_call.1} parent=0
    #allocation3 [shape = 'u8[65536]{0}', space=vmem, size = 0x10000, scoped, tag = 'input window, operand 0']
    #allocation4 [shape = 's32[2]{0}', space=sflag, size = 0x8, scoped, tag = 'scoped memory for tpu_custom_call.1']
    %6 = vsyncpa [#allocation4], 0
    %s7 = scalar_lea.sflag [#allocation4], 1
    %8 = vsyncpa %s7, 0
    loop: start=0, step=1, limit=4
    $region2: #{tpu_custom_call.1} parent=1 // loop_pre_header
      _
    $region3: #{tpu_custom_call.1} parent=1 // loop_header
      %s10 = sphi 0, %s14
      %p11 = scmp.ge.s32.totalorder %s10, 4
      %s17 = sphi 0, %s29
      %s18 = sphi 0, %s25
      %s19 = sphi 0, %s17
      %s20 = sphi 0, %s18
      %s21 = sphi 0, %s19
      %s22 = sphi 0, %s20
      %s34 = sphi 0, %s36
      %s37 = sphi 0, %s34
      %s38 = sphi 0, %s37
      %s54 = sphi 0, %s38
      %s60 = sphi 0, %s62
      %s63 = sphi 0, %s60
      %s64 = sphi 0, %s63
      %s80 = sphi 0, %s64
    $region4: #{tpu_custom_call.1} parent=1 // loop_header_branch
      %13 = sbr.rel (%p11) target = $region8
    $region5: #{tpu_custom_call.1} parent=1 // loop_body
      %s15 = ssub.s32 %s10, 1
      %s16 = ssub.s32 %s10, 2
      %s23 = sadd.s32 1, %s18
      %p24 = scmp.ge.s32.totalorder %s23, 1
      %s25 = scalar_select %p24, 0, %s23
      %s26 = sadd.s32 1, %s17
      %s27 = scalar_select %p24, %s26, %s17
      %p28 = scmp.ge.s32.totalorder %s27, 2
      %s29 = scalar_select %p28, 0, %s27
      %s30 = ssub.s32 %s17, %s29
      %s31 = ssub.s32 %s18, %s25
      %s32 = sor.u32 %s30, %s31
      %p33 = scmp.eq.s32.totalorder %s32, 0
      %s35 = sadd.s32 %s34, 1
      %s36 = scalar_select %p33, %s34, %s35
      %p39 = pneg %p33
      %p40 = scmp.eq.s32.totalorder %s10, 1
      %p41 = por %p39, %p40
      %p42 = scmp.ne.s32.totalorder %s34, %s37
      %p43 = scmp.eq.s32.totalorder %s10, 0
      %p44 = por %p42, %p43
      %p45 = scmp.ne.s32.totalorder %s34, %s37
      %p46 = scmp.eq.s32.totalorder %s15, 1
      %p47 = por %p45, %p46
      %p48 = scmp.ne.s32.totalorder %s37, %s38
      %p49 = scmp.eq.s32.totalorder %s15, 0
      %p50 = por %p48, %p49
      %p51 = scmp.ne.s32.totalorder %s37, %s38
      %p52 = scmp.eq.s32.totalorder %s16, 1
      %p53 = por %p51, %p52
      %p55 = scmp.ne.s32.totalorder %s38, %s54
      %p56 = scmp.eq.s32.totalorder %s16, 0
      %p57 = por %p55, %p56
      %s58 = ssub.s32 %s17, %s29
      %p59 = scmp.eq.s32.totalorder %s58, 0
      %s61 = sadd.s32 %s60, 1
      %s62 = scalar_select %p59, %s60, %s61
      %p65 = pneg %p59
      %p66 = scmp.eq.s32.totalorder %s10, 1
      %p67 = por %p65, %p66
      %p68 = scmp.ne.s32.totalorder %s60, %s63
      %p69 = scmp.eq.s32.totalorder %s10, 0
      %p70 = por %p68, %p69
      %p71 = scmp.ne.s32.totalorder %s60, %s63
      %p72 = scmp.eq.s32.totalorder %s15, 1
      %p73 = por %p71, %p72
      %p74 = scmp.ne.s32.totalorder %s63, %s64
      %p75 = scmp.eq.s32.totalorder %s15, 0
      %p76 = por %p74, %p75
      %p77 = scmp.ne.s32.totalorder %s63, %s64
      %p78 = scmp.eq.s32.totalorder %s16, 1
      %p79 = por %p77, %p78
      %p81 = scmp.ne.s32.totalorder %s64, %s80
      %p82 = scmp.eq.s32.totalorder %s16, 0
      %p83 = por %p81, %p82
      %p84 = scmp.le.s32.totalorder 1, %s10
      %p85 = scmp.lt.s32.totalorder %s10, 3
      %p86 = pnand %p84, %p85
      %p87 = pneg %p86
      // Predicated region
      $region9: #{tpu_custom_call.1} parent=5 // pred_check
        _
      $region10: #{tpu_custom_call.1} parent=5 // pred_check_branch
        %89 = sbr.rel (%p86) target = $region12
      $region11: #{tpu_custom_call.1} parent=5 // pred_region
        %s90 = ssub.s32 %s10, 1
      $region12: #{tpu_custom_call.1} parent=5 // pred_fallthru
        _
      %p91 = scmp.lt.s32.totalorder %s10, 2
      // Predicated region
      $region13: #{tpu_custom_call.1} parent=5 // pred_check
        %p92 = pneg %p91
      $region14: #{tpu_custom_call.1} parent=5 // pred_check_branch
        %94 = sbr.rel (%p92) target = $region16
      $region15: #{tpu_custom_call.1} parent=5 // pred_region
        // Predicated region
        $region17: #{tpu_custom_call.1} parent=15 // pred_check
          %p95 = pneg %p44
        $region18: #{tpu_custom_call.1} parent=15 // pred_check_branch
          %97 = sbr.rel (%p95) target = $region20
        $region19: #{tpu_custom_call.1} parent=15 // pred_region
          %s98 = sand.u32 %s34, 1
          %s99 = scalar_lea.sflag [#allocation4], %s98
          %s100 = sand.u32 %s34, 1
          %s101 = smul.addr %s100, 64
          %s102 = scalar_lea.vmem [#allocation3], %s101
          %s104 = ssub.s32 1024, 1024
          %105 = vsyncadd %s99, %s104
          %s106 = smul.addr %s17, 8
          %s107 = sadd.s32 %s18, %s106
          %s108 = smul.addr %s107, 128
          %s109 = scalar_lea.hbm %s0, %s108
          %s110 = sshll.u32 %s102, 4
          %s111 = int_to_ptr.vmem [resolvable:$true] %s110
          %116 = dma.hbm_to_vmem [thread:$0]  %s109, 1024, %s111, %s99, 128, 128, 8
        $region20: #{tpu_custom_call.1} parent=15 // pred_fallthru
          _
      $region16: #{tpu_custom_call.1} parent=5 // pred_fallthru
        _
      %p117 = scmp.le.s32.totalorder 1, %s10
      %p118 = scmp.lt.s32.totalorder %s10, 3
      %p119 = pnand %p117, %p118
      %p120 = pneg %p119
      // Predicated region
      $region21: #{tpu_custom_call.1} parent=5 // pred_check
        _
      $region22: #{tpu_custom_call.1} parent=5 // pred_check_branch
        %122 = sbr.rel (%p119) target = $region24
      $region23: #{tpu_custom_call.1} parent=5 // pred_region
        %s123 = ssub.s32 %s10, 1
        %s124 = sand.u32 %s37, 1
        %s125 = scalar_lea.sflag [#allocation4], %s124
        %s126 = sand.u32 %s37, 1
        %s127 = smul.addr %s126, 64
        %s128 = scalar_lea.vmem [#allocation3], %s127
        // Predicated region
        $region25: #{tpu_custom_call.1} parent=23 // pred_check
          %p129 = pneg %p50
        $region26: #{tpu_custom_call.1} parent=23 // pred_check_branch
          %131 = sbr.rel (%p129) target = $region28
        $region27: #{tpu_custom_call.1} parent=23 // pred_region
          %132 = dma.done %s125, 1024
        $region28: #{tpu_custom_call.1} parent=23 // pred_fallthru
          _
        %s133 = sand.u32 %s37, 1
        %s134 = scalar_lea.sflag [#allocation4], %s133
        %s135 = sand.u32 %s37, 1
        %s136 = smul.addr %s135, 64
        %s137 = scalar_lea.vmem [#allocation3], %s136
        %p138 = pneg %p50
        %p139 = pneg %p47
        %p140 = pneg %p76
        %p141 = pneg %p73
        %p142 = scmp.lt.s32.totalorder %s19, 1
        %s143 = scalar_select %p142, %s19, 1
        %s144 = smul.addr %s143, 8
        %s145 = smul.addr %s144, 8
        %s146 = scalar_lea.vmem %s1, %s145
        %p147 = scmp.lt.s32.totalorder %s19, 1
        %s148 = scalar_select %p147, %s19, 1
        %s149 = smul.addr %s148, 8
        %s150 = smul.addr %s149, 8
        %s151 = scalar_lea.vmem %s1, %s150
        %p152 = scmp.eq.s32.totalorder %s20, 0
        // Predicated region
        $region29: #{tpu_custom_call.1} parent=23 // pred_check
          %p153 = pneg %p152
        $region30: #{tpu_custom_call.1} parent=23 // pred_check_branch
          %155 = sbr.rel (%p153) target = $region32
        $region31: #{tpu_custom_call.1} parent=23 // pred_region
          %156 = vst [vmem:[#allocation2] sm:$0xff] 0.0
          %157 = vst [vmem:[#allocation2 + $0x8] sm:$0xff] 0.0
          %158 = vst [vmem:[#allocation2 + $0x10] sm:$0xff] 0.0
          %159 = vst [vmem:[#allocation2 + $0x18] sm:$0xff] 0.0
          %160 = vst [vmem:[#allocation2 + $0x20] sm:$0xff] 0.0
          %161 = vst [vmem:[#allocation2 + $0x28] sm:$0xff] 0.0
          %162 = vst [vmem:[#allocation2 + $0x30] sm:$0xff] 0.0
          %163 = vst [vmem:[#allocation2 + $0x38] sm:$0xff] 0.0
        $region32: #{tpu_custom_call.1} parent=23 // pred_fallthru
          _
        %v164 = vld [vmem:[#allocation2] sm:$0xff]
        %v165 = vld [vmem:[#allocation2 + $0x8] sm:$0xff]
        %v166 = vld [vmem:[#allocation2 + $0x10] sm:$0xff]
        %v167 = vld [vmem:[#allocation2 + $0x18] sm:$0xff]
        %v168 = vld [vmem:[#allocation2 + $0x20] sm:$0xff]
        %v169 = vld [vmem:[#allocation2 + $0x28] sm:$0xff]
        %v170 = vld [vmem:[#allocation2 + $0x30] sm:$0xff]
        %v171 = vld [vmem:[#allocation2 + $0x38] sm:$0xff]
        %v172 = vld [vmem:[%s128] sm:$0xff]
        %v173 = vld [vmem:[%s128 + $0x8] sm:$0xff]
        %v174 = vld [vmem:[%s128 + $0x10] sm:$0xff]
        %v175 = vld [vmem:[%s128 + $0x18] sm:$0xff]
        %v176 = vld [vmem:[%s128 + $0x20] sm:$0xff]
        %v177 = vld [vmem:[%s128 + $0x28] sm:$0xff]
        %v178 = vld [vmem:[%s128 + $0x30] sm:$0xff]
        %v179 = vld [vmem:[%s128 + $0x38] sm:$0xff]
        %v180 = vadd.f32 %v164, %v172
        %v181 = vadd.f32 %v165, %v173
        %v182 = vadd.f32 %v166, %v174
        %v183 = vadd.f32 %v167, %v175
        %v184 = vadd.f32 %v168, %v176
        %v185 = vadd.f32 %v169, %v177
        %v186 = vadd.f32 %v170, %v178
        %v187 = vadd.f32 %v171, %v179
        %188 = vst [vmem:[#allocation2] sm:$0xff] %v180
        %189 = vst [vmem:[#allocation2 + $0x8] sm:$0xff] %v181
        %190 = vst [vmem:[#allocation2 + $0x10] sm:$0xff] %v182
        %191 = vst [vmem:[#allocation2 + $0x18] sm:$0xff] %v183
        %192 = vst [vmem:[#allocation2 + $0x20] sm:$0xff] %v184
        %193 = vst [vmem:[#allocation2 + $0x28] sm:$0xff] %v185
        %194 = vst [vmem:[#allocation2 + $0x30] sm:$0xff] %v186
        %195 = vst [vmem:[#allocation2 + $0x38] sm:$0xff] %v187
        // Predicated region
        $region33: #{tpu_custom_call.1} parent=23 // pred_check
          %p196 = pneg %p152
        $region34: #{tpu_custom_call.1} parent=23 // pred_check_branch
          %198 = sbr.rel (%p196) target = $region36
        $region35: #{tpu_custom_call.1} parent=23 // pred_region
          %v199 = vld [vmem:[#allocation2] sm:$0xff]
          %v200 = vld [vmem:[#allocation2 + $0x8] sm:$0xff]
          %v201 = vld [vmem:[#allocation2 + $0x10] sm:$0xff]
          %v202 = vld [vmem:[#allocation2 + $0x18] sm:$0xff]
          %v203 = vld [vmem:[#allocation2 + $0x20] sm:$0xff]
          %v204 = vld [vmem:[#allocation2 + $0x28] sm:$0xff]
          %v205 = vld [vmem:[#allocation2 + $0x30] sm:$0xff]
          %v206 = vld [vmem:[#allocation2 + $0x38] sm:$0xff]
          %207 = vadd.xlane.f32.xlu0 %v199
          %v208 = vpop.xlane.xlu0 %207
          %209 = vadd.xlane.f32.xlu0 %v200
          %v210 = vpop.xlane.xlu0 %209
          %211 = vadd.xlane.f32.xlu0 %v201
          %v212 = vpop.xlane.xlu0 %211
          %213 = vadd.xlane.f32.xlu0 %v202
          %v214 = vpop.xlane.xlu0 %213
          %215 = vadd.xlane.f32.xlu0 %v203
          %v216 = vpop.xlane.xlu0 %215
          %217 = vadd.xlane.f32.xlu0 %v204
          %v218 = vpop.xlane.xlu0 %217
          %219 = vadd.xlane.f32.xlu0 %v205
          %v220 = vpop.xlane.xlu0 %219
          %221 = vadd.xlane.f32.xlu0 %v206
          %v222 = vpop.xlane.xlu0 %221
          %vm223 = vcmask 7168
          %224 = vst.msk [vmem:[%s151] sm:$0xff] %vm223, %v208
          %225 = vst.msk [vmem:[%s151 + $0x8] sm:$0xff] %vm223, %v210
          %226 = vst.msk [vmem:[%s151 + $0x10] sm:$0xff] %vm223, %v212
          %227 = vst.msk [vmem:[%s151 + $0x18] sm:$0xff] %vm223, %v214
          %228 = vst.msk [vmem:[%s151 + $0x20] sm:$0xff] %vm223, %v216
          %229 = vst.msk [vmem:[%s151 + $0x28] sm:$0xff] %vm223, %v218
          %230 = vst.msk [vmem:[%s151 + $0x30] sm:$0xff] %vm223, %v220
          %231 = vst.msk [vmem:[%s151 + $0x38] sm:$0xff] %vm223, %v222
        $region36: #{tpu_custom_call.1} parent=23 // pred_fallthru
          _
        %p232 = scmp.lt.s32.totalorder %s19, 1
        %s233 = scalar_select %p232, %s19, 1
        %s234 = smul.addr %s233, 8
        %s235 = smul.addr %s234, 8
        %s236 = scalar_lea.vmem %s1, %s235
        // Predicated region
        $region37: #{tpu_custom_call.1} parent=23 // pred_check
          %p237 = pneg %p73
        $region38: #{tpu_custom_call.1} parent=23 // pred_check_branch
          %239 = sbr.rel (%p237) target = $region40
        $region39: #{tpu_custom_call.1} parent=23 // pred_region
          _
        $region40: #{tpu_custom_call.1} parent=23 // pred_fallthru
          _
      $region24: #{tpu_custom_call.1} parent=5 // pred_fallthru
        _
      %p240 = scmp.le.s32.totalorder 2, %s10
      // Predicated region
      $region41: #{tpu_custom_call.1} parent=5 // pred_check
        %p241 = pneg %p240
      $region42: #{tpu_custom_call.1} parent=5 // pred_check_branch
        %243 = sbr.rel (%p241) target = $region44
      $region43: #{tpu_custom_call.1} parent=5 // pred_region
        %s244 = ssub.s32 %s10, 2
        // Predicated region
        $region45: #{tpu_custom_call.1} parent=43 // pred_check
          %p245 = pneg %p79
        $region46: #{tpu_custom_call.1} parent=43 // pred_check_branch
          %247 = sbr.rel (%p245) target = $region48
        $region47: #{tpu_custom_call.1} parent=43 // pred_region
          %p248 = scmp.lt.s32.totalorder %s21, 1
          %s249 = scalar_select %p248, %s21, 1
          %s250 = smul.addr %s249, 8
          %s251 = smul.addr %s250, 8
          %s252 = scalar_lea.vmem %s1, %s251
        $region48: #{tpu_custom_call.1} parent=43 // pred_fallthru
          _
      $region44: #{tpu_custom_call.1} parent=5 // pred_fallthru
        _
    $region6: #{tpu_custom_call.1} parent=1 // loop_footer
      %s14 = sadd.s32 1, %s10
    $region7: #{tpu_custom_call.1} parent=1 // loop_footer_branch
      %9 = sbr.rel target = $region3
    $region8: #{tpu_custom_call.1} parent=1 // loop_exit
      _
    %253 = vsyncpa [#allocation4], 1
    %s254 = scalar_lea.sflag [#allocation4], 1
    %255 = vsyncpa %s254, 1

</llo_original>
